<compile_context>
chip_gen: v7x
topology: tpu7x:2x2x1
jax: 0.10.0
libtpu: 0.0.40
codegen_flags: <defaults>
</compile_context>

<pallas_src>
import math

import jax
import jax.numpy as jnp
from jax.experimental import pallas as pl
from jax.experimental.pallas import tpu as pltpu


def _activation_fn(name):
    if name == "none":
        return lambda v: v
    if name == "relu":
        return lambda v: jnp.maximum(v, 0.0)
    if name == "sigmoid":
        return jax.nn.sigmoid
    if name == "tanh":
        return jnp.tanh
    raise NotImplementedError(name)


def make_coagent_kernel(num_layers, units, activation, std, greedy):
    """Fused kernel for one batch tile of the whole coagent forward pass."""
    act = _activation_fn(activation)

    def kernel(*refs):
        # inputs: x, noise_slab, (W_i, b_i) * L, wf_row, bf
        x_ref, noise_ref = refs[0], refs[1]
        layer_refs = refs[2:2 + 2 * num_layers]
        wf_ref = refs[2 + 2 * num_layers]          # (1, U)  f32 head weight row
        bf_ref = refs[3 + 2 * num_layers]          # (1, 1)  f32 head bias
        head_ref = refs[4 + 2 * num_layers]        # (TB, 1) f32
        slab_ref = refs[5 + 2 * num_layers]        # (TB, 2*L*U) f32

        state_mxu = x_ref[...]                     # bf16 activations feed the MXU
        pres, states = [], []
        for i in range(num_layers):
            w_ref = layer_refs[2 * i]              # bf16 (fan_in, U)
            b_ref = layer_refs[2 * i + 1]          # f32  (1, U)
            mean = (
                jnp.dot(state_mxu, w_ref[...],
                        preferred_element_type=jnp.float32)
                + b_ref[...]
            )
            if greedy:
                pre = mean
            else:
                pre = mean + std * noise_ref[:, i * units:(i + 1) * units]
            state = act(pre)                       # f32 on VPU/EUP
            pres.append(pre)
            states.append(state)
            state_mxu = state.astype(jnp.bfloat16)

        # Single lane-dense store: [pre_0 .. pre_{L-1} | state_0 .. state_{L-1}]
        slab_ref[...] = jnp.concatenate(pres + states, axis=-1)

        # Final head has out_features == 1: VPU multiply + XLU lane reduction
        # instead of an N=1 MXU matmul.
        head_ref[...] = (
            jnp.sum(states[-1] * wf_ref[...], axis=-1, keepdims=True)
            + bf_ref[...]
        )

    return kernel


def coagent_forward(x, layer_params, noises, *, activation, std, greedy=False,
                    batch_tile=128):
    """layer_params: list of (W[in,out], b[1,out]); last entry is the final head.
    noises: list of num_layers arrays (B, units) ~ N(0,1) (ignored if greedy)."""
    num_layers = len(layer_params) - 1
    B, in_features = x.shape
    U = layer_params[0][0].shape[1]

    # ---- batch tiling --------------------------------------------------------
    TB = batch_tile if B >= batch_tile else B
    nb = pl.cdiv(B, TB)
    B_pad = nb * TB

    def pad_rows(a):
        if a.shape[0] == B_pad:
            return a
        return jnp.pad(a, ((0, B_pad - a.shape[0]), (0, 0)))

    x_in = pad_rows(x).astype(jnp.bfloat16)
    if greedy or noises is None:
        noise_slab = jnp.zeros((B_pad, num_layers * U), jnp.float32)
    else:
        noise_slab = pad_rows(jnp.concatenate(noises, axis=-1))

    inputs = [x_in, noise_slab]
    in_specs = [
        pl.BlockSpec((TB, in_features), lambda b: (b, 0)),
        pl.BlockSpec((TB, num_layers * U), lambda b: (b, 0)),
    ]
    for i in range(num_layers):
        w, bias = layer_params[i]
        inputs += [w.astype(jnp.bfloat16), bias]
        in_specs += [
            pl.BlockSpec(w.shape, lambda b: (0, 0)),        # weights resident
            pl.BlockSpec(bias.shape, lambda b: (0, 0)),
        ]
    w_f, b_f = layer_params[-1]
    wf_row = w_f.T                                          # (1, U), stays f32
    inputs += [wf_row, b_f]
    in_specs += [
        pl.BlockSpec(wf_row.shape, lambda b: (0, 0)),
        pl.BlockSpec(b_f.shape, lambda b: (0, 0)),
    ]

    slab_width = 2 * num_layers * U
    out_shape = (
        jax.ShapeDtypeStruct((B_pad, 1), jnp.float32),            # head output
        jax.ShapeDtypeStruct((B_pad, slab_width), jnp.float32),   # pre|state slab
    )
    out_specs = (
        pl.BlockSpec((TB, 1), lambda b: (b, 0)),
        pl.BlockSpec((TB, slab_width), lambda b: (b, 0)),
    )

    flops = int(2 * B_pad * (in_features * U + (num_layers - 1) * U * U + U))
    transcendentals = int(
        num_layers * B_pad * U if activation in ("sigmoid", "tanh") else 0
    )
    bytes_accessed = int(
        sum(a.size * a.dtype.itemsize for a in inputs)
        + sum(math.prod(s.shape) * jnp.dtype(s.dtype).itemsize for s in out_shape)
    )

    kernel = make_coagent_kernel(num_layers, U, activation, float(std), greedy)

    head_pad, slab = pl.pallas_call(
        kernel,
        out_shape=out_shape,
        grid=(nb,),
        in_specs=in_specs,
        out_specs=out_specs,
        compiler_params=pltpu.CompilerParams(
            dimension_semantics=("parallel",),
            vmem_limit_bytes=48 * 1024 * 1024,
        ),
        cost_estimate=pl.CostEstimate(
            flops=flops,
            transcendentals=transcendentals,
            bytes_accessed=bytes_accessed,
        ),
    )(*inputs)

    head = head_pad[:B]
    slab = slab[:B]
    preacts = [slab[:, i * U:(i + 1) * U] for i in range(num_layers)]
    states = [slab[:, (num_layers + i) * U:(num_layers + i + 1) * U]
              for i in range(num_layers)]
    return head, states, preacts


def _init_linear(key, fan_in, fan_out):
    """PyTorch-style init U(-1/sqrt(fan_in), 1/sqrt(fan_in)).
    Returns W transposed to (fan_in, fan_out) and b as (1, fan_out), f32."""
    kw, kb = jax.random.split(key)
    bound = 1.0 / jnp.sqrt(jnp.float32(fan_in))
    w = jax.random.uniform(kw, (fan_in, fan_out), jnp.float32, -bound, bound)
    b = jax.random.uniform(kb, (1, fan_out), jnp.float32, -bound, bound)
    return w, b


def _reference_forward(x, layer_params, noises, *, activation, std, greedy):
    """Pure-JAX f32 reference mirroring the PyTorch module."""
    act = _activation_fn(activation)
    num_layers = len(layer_params) - 1
    state = x
    states, preacts = [], []
    for i in range(num_layers):
        w, b = layer_params[i]
        mean = state @ w + b
        pre = mean if greedy else mean + std * noises[i]
        state = act(pre)
        states.append(state)
        preacts.append(pre)
    wf, bf = layer_params[-1]
    return state @ wf + bf, states, preacts


if __name__ == "__main__":
    # Module config (params dict equivalent)
    in_features = 16
    units_layer = 32
    num_layers = 2
    batch_size = 8
    model_std = 0.5
    activation = "tanh"

    root = jax.random.PRNGKey(0)
    k_x, k_n, k_p = jax.random.split(root, 3)

    # Deterministic parameters: num_layers hidden linears + final head to 1.
    p_keys = jax.random.split(k_p, num_layers + 1)
    layer_params = []
    for i in range(num_layers + 1):
        if i == 0:
            layer_params.append(_init_linear(p_keys[i], in_features, units_layer))
        elif i == num_layers:
            layer_params.append(_init_linear(p_keys[i], units_layer, 1))
        else:
            layer_params.append(_init_linear(p_keys[i], units_layer, units_layer))

    x = jax.random.normal(k_x, (batch_size, in_features), jnp.float32)
    n_keys = jax.random.split(k_n, num_layers)
    noises = [
        jax.random.normal(n_keys[i], (batch_size, units_layer), jnp.float32)
        for i in range(num_layers)
    ]

    out, states, preacts = coagent_forward(
        x, layer_params, noises, activation=activation, std=model_std, greedy=False
    )
    jax.block_until_ready(out)

    # Sanity check against a pure-JAX f32 reference. Tolerance is loosened to
    # cover bf16 MXU operands (f32 accumulation), per the perf review.
    ref_out, ref_states, ref_pre = _reference_forward(
        x, layer_params, noises, activation=activation, std=model_std, greedy=False
    )
    assert jnp.allclose(out, ref_out, atol=3e-2, rtol=3e-2)
    for a, b in zip(states, ref_states):
        assert jnp.allclose(a, b, atol=3e-2, rtol=3e-2)
    for a, b in zip(preacts, ref_pre):
        assert jnp.allclose(a, b, atol=3e-2, rtol=3e-2)

    print("KERNEL_OK")
</pallas_src>

<mosaic_0001>
module attributes {stable_mosaic.version = 11 : i64} {
  func.func @kernel(%arg0: i32, %arg1: memref<8x16xbf16, #tpu.memory_space<vmem>>, %arg2: memref<8x64xf32, #tpu.memory_space<vmem>>, %arg3: memref<16x32xbf16, #tpu.memory_space<vmem>>, %arg4: memref<1x32xf32, #tpu.memory_space<vmem>>, %arg5: memref<32x32xbf16, #tpu.memory_space<vmem>>, %arg6: memref<1x32xf32, #tpu.memory_space<vmem>>, %arg7: memref<1x32xf32, #tpu.memory_space<vmem>>, %arg8: memref<1x1xf32, #tpu.memory_space<vmem>>, %arg9: memref<8x1xf32, #tpu.memory_space<vmem>>, %arg10: memref<8x128xf32, #tpu.memory_space<vmem>>) attributes {dimension_semantics = [#tpu.dimension_semantics<parallel>], iteration_bounds = array<i64: 1>, scalar_prefetch = 0 : i64, scratch_operands = 0 : i64, tpu.core_type = #tpu.core_type<tc>, window_params = [{transform_indices = @transform_0, window_bounds = array<i64: 8, 16>}, {transform_indices = @transform_1, window_bounds = array<i64: 8, 64>}, {pipeline_mode = #tpu.pipeline_mode<synchronous>, transform_indices = @transform_2, window_bounds = array<i64: 16, 32>}, {pipeline_mode = #tpu.pipeline_mode<synchronous>, transform_indices = @transform_3, window_bounds = array<i64: 1, 32>}, {pipeline_mode = #tpu.pipeline_mode<synchronous>, transform_indices = @transform_4, window_bounds = array<i64: 32, 32>}, {pipeline_mode = #tpu.pipeline_mode<synchronous>, transform_indices = @transform_5, window_bounds = array<i64: 1, 32>}, {pipeline_mode = #tpu.pipeline_mode<synchronous>, transform_indices = @transform_6, window_bounds = array<i64: 1, 32>}, {pipeline_mode = #tpu.pipeline_mode<synchronous>, transform_indices = @transform_7, window_bounds = array<i64: 1, 1>}, {transform_indices = @transform_8, window_bounds = array<i64: 8, 1>}, {transform_indices = @transform_9, window_bounds = array<i64: 8, 128>}]} {
    %c0 = arith.constant 0 : index
    %c0_0 = arith.constant 0 : index
    %0 = vector.load %arg1[%c0, %c0_0] : memref<8x16xbf16, #tpu.memory_space<vmem>>, vector<8x16xbf16>
    %c0_1 = arith.constant 0 : index
    %c0_2 = arith.constant 0 : index
    %1 = vector.load %arg3[%c0_1, %c0_2] : memref<16x32xbf16, #tpu.memory_space<vmem>>, vector<16x32xbf16>
    %cst = arith.constant dense<0.000000e+00> : vector<8x32xf32>
    %2 = tpu.matmul %0, %1, %cst {dimension_numbers = #tpu.dot_dimension_numbers<[1], [0], [0], [1], [0, 0, 1, 1], [], []>} : vector<8x16xbf16>, vector<16x32xbf16>, vector<8x32xf32> -> vector<8x32xf32>
    %c0_3 = arith.constant 0 : index
    %c0_4 = arith.constant 0 : index
    %3 = vector.load %arg4[%c0_3, %c0_4] : memref<1x32xf32, #tpu.memory_space<vmem>>, vector<1x32xf32>
    %4 = vector.broadcast %3 : vector<1x32xf32> to vector<8x32xf32>
    %5 = arith.addf %2, %4 : vector<8x32xf32>
    %c0_5 = arith.constant 0 : index
    %c0_6 = arith.constant 0 : index
    %6 = vector.load %arg2[%c0_5, %c0_6] : memref<8x64xf32, #tpu.memory_space<vmem>>, vector<8x32xf32>
    %cst_7 = arith.constant 5.000000e-01 : f32
    %7 = vector.broadcast %cst_7 : f32 to vector<8x32xf32>
    %8 = arith.mulf %7, %6 : vector<8x32xf32>
    %9 = arith.addf %5, %8 : vector<8x32xf32>
    %10 = math.tanh %9 : vector<8x32xf32>
    %11 = arith.truncf %10 : vector<8x32xf32> to vector<8x32xbf16>
    %c0_8 = arith.constant 0 : index
    %c0_9 = arith.constant 0 : index
    %12 = vector.load %arg5[%c0_8, %c0_9] : memref<32x32xbf16, #tpu.memory_space<vmem>>, vector<32x32xbf16>
    %cst_10 = arith.constant dense<0.000000e+00> : vector<8x32xf32>
    %13 = tpu.matmul %11, %12, %cst_10 {dimension_numbers = #tpu.dot_dimension_numbers<[1], [0], [0], [1], [0, 0, 1, 1], [], []>} : vector<8x32xbf16>, vector<32x32xbf16>, vector<8x32xf32> -> vector<8x32xf32>
    %c0_11 = arith.constant 0 : index
    %c0_12 = arith.constant 0 : index
    %14 = vector.load %arg6[%c0_11, %c0_12] : memref<1x32xf32, #tpu.memory_space<vmem>>, vector<1x32xf32>
    %15 = vector.broadcast %14 : vector<1x32xf32> to vector<8x32xf32>
    %16 = arith.addf %13, %15 : vector<8x32xf32>
    %c0_13 = arith.constant 0 : index
    %c32 = arith.constant 32 : index
    %17 = vector.load %arg2[%c0_13, %c32] : memref<8x64xf32, #tpu.memory_space<vmem>>, vector<8x32xf32>
    %cst_14 = arith.constant 5.000000e-01 : f32
    %18 = vector.broadcast %cst_14 : f32 to vector<8x32xf32>
    %19 = arith.mulf %18, %17 : vector<8x32xf32>
    %20 = arith.addf %16, %19 : vector<8x32xf32>
    %21 = math.tanh %20 : vector<8x32xf32>
    %22 = tpu.concatenate %9, %20, %10, %21 in 1 : vector<8x32xf32>, vector<8x32xf32>, vector<8x32xf32>, vector<8x32xf32> -> vector<8x128xf32>
    %c0_15 = arith.constant 0 : index
    %c0_16 = arith.constant 0 : index
    %23 = vector.load %arg10[%c0_15, %c0_16] : memref<8x128xf32, #tpu.memory_space<vmem>>, vector<8x128xf32>
    tpu.vector_store %arg10[%c0_15, %c0_16], %22 {strides = array<i32>} : memref<8x128xf32, #tpu.memory_space<vmem>>, vector<8x128xf32>,
    %c0_17 = arith.constant 0 : index
    %c0_18 = arith.constant 0 : index
    %24 = vector.load %arg7[%c0_17, %c0_18] : memref<1x32xf32, #tpu.memory_space<vmem>>, vector<1x32xf32>
    %25 = vector.broadcast %24 : vector<1x32xf32> to vector<8x32xf32>
    %26 = arith.mulf %21, %25 : vector<8x32xf32>
    %cst_19 = arith.constant dense<0.000000e+00> : vector<8xf32>
    %27 = vector.multi_reduction <add>, %26, %cst_19 [1] : vector<8x32xf32> to vector<8xf32>
    %28 = vector.shape_cast %27 : vector<8xf32> to vector<8x1xf32>
    %c0_20 = arith.constant 0 : index
    %c0_21 = arith.constant 0 : index
    %29 = vector.load %arg8[%c0_20, %c0_21] : memref<1x1xf32, #tpu.memory_space<vmem>>, vector<1x1xf32>
    %30 = vector.broadcast %29 : vector<1x1xf32> to vector<8x1xf32>
    %31 = arith.addf %28, %30 : vector<8x1xf32>
    %c0_22 = arith.constant 0 : index
    %c0_23 = arith.constant 0 : index
    %32 = vector.load %arg9[%c0_22, %c0_23] : memref<8x1xf32, #tpu.memory_space<vmem>>, vector<8x1xf32>
    tpu.vector_store %arg9[%c0_22, %c0_23], %31 {strides = array<i32>} : memref<8x1xf32, #tpu.memory_space<vmem>>, vector<8x1xf32>,
    return
  }
  func.func @transform_0(%arg0: i32) -> (i32, i32) {
    %c0_i32 = arith.constant 0 : i32
    %c0_i32_0 = arith.constant 0 : i32
    return %arg0, %c0_i32 : i32, i32
  }
  func.func @transform_1(%arg0: i32) -> (i32, i32) {
    %c0_i32 = arith.constant 0 : i32
    %c0_i32_0 = arith.constant 0 : i32
    return %arg0, %c0_i32 : i32, i32
  }
  func.func @transform_2(%arg0: i32) -> (i32, i32) {
    %c0_i32 = arith.constant 0 : i32
    %c0_i32_0 = arith.constant 0 : i32
    %c0_i32_1 = arith.constant 0 : i32
    return %c0_i32, %c0_i32_0 : i32, i32
  }
  func.func @transform_3(%arg0: i32) -> (i32, i32) {
    %c0_i32 = arith.constant 0 : i32
    %c0_i32_0 = arith.constant 0 : i32
    %c0_i32_1 = arith.constant 0 : i32
    return %c0_i32, %c0_i32_0 : i32, i32
  }
  func.func @transform_4(%arg0: i32) -> (i32, i32) {
    %c0_i32 = arith.constant 0 : i32
    %c0_i32_0 = arith.constant 0 : i32
    %c0_i32_1 = arith.constant 0 : i32
    return %c0_i32, %c0_i32_0 : i32, i32
  }
  func.func @transform_5(%arg0: i32) -> (i32, i32) {
    %c0_i32 = arith.constant 0 : i32
    %c0_i32_0 = arith.constant 0 : i32
    %c0_i32_1 = arith.constant 0 : i32
    return %c0_i32, %c0_i32_0 : i32, i32
  }
  func.func @transform_6(%arg0: i32) -> (i32, i32) {
    %c0_i32 = arith.constant 0 : i32
    %c0_i32_0 = arith.constant 0 : i32
    %c0_i32_1 = arith.constant 0 : i32
    return %c0_i32, %c0_i32_0 : i32, i32
  }
  func.func @transform_7(%arg0: i32) -> (i32, i32) {
    %c0_i32 = arith.constant 0 : i32
    %c0_i32_0 = arith.constant 0 : i32
    %c0_i32_1 = arith.constant 0 : i32
    return %c0_i32, %c0_i32_0 : i32, i32
  }
  func.func @transform_8(%arg0: i32) -> (i32, i32) {
    %c0_i32 = arith.constant 0 : i32
    %c0_i32_0 = arith.constant 0 : i32
    return %arg0, %c0_i32 : i32, i32
  }
  func.func @transform_9(%arg0: i32) -> (i32, i32) {
    %c0_i32 = arith.constant 0 : i32
    %c0_i32_0 = arith.constant 0 : i32
    return %arg0, %c0_i32 : i32, i32
  }
}

</mosaic_0001>

<llo_original>
// kernel: tpu_custom_call.1
$region0: #{tpu_custom_call.1}
  #allocation0 [shape = 'u32[]', space=smem, size = 0x4, offset = 0x4, fixed_abs, tag = 'smem constant byte address 0x4 - core index']
  #allocation1 [shape = 'u32[144,128]{1,0:T(1,128)}', space=vmem, size = 0x12000, scoped, tag = 'internal scratch']
  #allocation2 [shape = 'f32[1,1]{1,0:T(1,128)S(1)}', space=vmem, size = 0x200, scoped, tag = 'scoped memory for tpu_custom_call.1']
  %s0 = inlined_call_operand.hbm [shape: bf16[8,16], index: 0, kind: input, shape index: {}]
  %s1 = inlined_call_operand.hbm [shape: f32[8,64], index: 1, kind: input, shape index: {}]
  %s2 = inlined_call_operand.hbm [shape: bf16[16,32], index: 2, kind: input, shape index: {}]
  %s3 = inlined_call_operand.vmem [shape: f32[1,32], index: 3, kind: input, shape index: {}]
  %s4 = inlined_call_operand.vmem [shape: bf16[32,32], index: 4, kind: input, shape index: {}]
  %s5 = inlined_call_operand.vmem [shape: f32[1,32], index: 5, kind: input, shape index: {}]
  %s6 = inlined_call_operand.vmem [shape: f32[1,32], index: 6, kind: input, shape index: {}]
  %s7 = inlined_call_operand.<no memory space> [shape: f32[1,1], index: 7, kind: input, shape index: {}]
  %s8 = inlined_call_operand.vmem [shape: f32[8,1], index: 8, kind: output, shape index: {0}]
  %s9 = inlined_call_operand.hbm [shape: f32[8,128], index: 9, kind: output, shape index: {1}]
  %10 = xla_tuple %s8, %s9
  %s11 = sld [smem:[#allocation0]]
  $region62: #{tpu_custom_call.1} parent=0
    _
  %s13 = ssub.s32 1, %s11
  %s14 = scalar_select 0, %s13, %s11
  %v15 = vstv %s7
  %16 = vst [vmem:[#allocation2] sm:$0x1] %v15
  $region1: #{tpu_custom_call.1} parent=0
    #allocation3 [shape = 'u8[2048]{0}', space=vmem, size = 0x800, scoped, tag = 'input window, operand 0, single buffered']
    #allocation4 [shape = 's32[1]{0}', space=sflag, size = 0x4, scoped, tag = 'scoped memory for tpu_custom_call.1']
    #allocation5 [shape = 's32[1]{0}', space=sflag, size = 0x4, scoped, tag = 'scoped memory for tpu_custom_call.1']
    #allocation6 [shape = 'u8[4096]{0}', space=vmem, size = 0x1000, scoped, tag = 'input window, operand 1, single buffered']
    #allocation7 [shape = 's32[1]{0}', space=sflag, size = 0x4, scoped, tag = 'scoped memory for tpu_custom_call.1']
    #allocation8 [shape = 'u8[4096]{0}', space=vmem, size = 0x1000, scoped, tag = 'input window, operand 2, single buffered']
    #allocation9 [shape = 'u8[4096]{0}', space=vmem, size = 0x1000, scoped, tag = 'output window, operand 1, single buffered']
    %17 = vsyncpa [#allocation4], 0
    %18 = vsyncpa [#allocation7], 0
    %19 = vsyncpa [#allocation5], 0
    // Predicated region
    $region2: #{tpu_custom_call.1} parent=1 // pred_check
      _
    $region3: #{tpu_custom_call.1} parent=1 // pred_check_branch
      %21 = sbr.rel (0) target = $region5
    $region4: #{tpu_custom_call.1} parent=1 // pred_region
      %s23 = ssub.s32 64, 64
      %24 = vsyncadd [#allocation4], %s23
      %s26 = sshll.u32 [#allocation3], 4
      %s27 = int_to_ptr.vmem [resolvable:$true] %s26
      %29 = dma.hbm_to_vmem [thread:$0]  %s0, 64, %s27, [#allocation4]
    $region5: #{tpu_custom_call.1} parent=1 // pred_fallthru
      _
    // Predicated region
    $region6: #{tpu_custom_call.1} parent=1 // pred_check
      _
    $region7: #{tpu_custom_call.1} parent=1 // pred_check_branch
      %31 = sbr.rel (0) target = $region9
    $region8: #{tpu_custom_call.1} parent=1 // pred_region
      %s33 = ssub.s32 128, 128
      %34 = vsyncadd [#allocation7], %s33
      %s36 = sshll.u32 [#allocation6], 4
      %s37 = int_to_ptr.vmem [resolvable:$true] %s36
      %39 = dma.hbm_to_vmem [thread:$0]  %s1, 128, %s37, [#allocation7]
    $region9: #{tpu_custom_call.1} parent=1 // pred_fallthru
      _
    // Predicated region
    $region10: #{tpu_custom_call.1} parent=1 // pred_check
      _
    $region11: #{tpu_custom_call.1} parent=1 // pred_check_branch
      %41 = sbr.rel (0) target = $region13
    $region12: #{tpu_custom_call.1} parent=1 // pred_region
      %s43 = ssub.s32 128, 128
      %44 = vsyncadd [#allocation7], %s43
      %s45 = sshll.u32 [#allocation8], 4
      %s46 = int_to_ptr.vmem [resolvable:$true] %s45
      %51 = dma.hbm_to_vmem [thread:$0]  %s2, 128, %s46, [#allocation7], 64, 64, 4
    $region13: #{tpu_custom_call.1} parent=1 // pred_fallthru
      _
    // Predicated region
    $region14: #{tpu_custom_call.1} parent=1 // pred_check
      _
    $region15: #{tpu_custom_call.1} parent=1 // pred_check_branch
      %53 = sbr.rel (0) target = $region17
    $region16: #{tpu_custom_call.1} parent=1 // pred_region
      _
    $region17: #{tpu_custom_call.1} parent=1 // pred_fallthru
      _
    // Predicated region
    $region18: #{tpu_custom_call.1} parent=1 // pred_check
      _
    $region19: #{tpu_custom_call.1} parent=1 // pred_check_branch
      %55 = sbr.rel (0) target = $region21
    $region20: #{tpu_custom_call.1} parent=1 // pred_region
      _
    $region21: #{tpu_custom_call.1} parent=1 // pred_fallthru
      _
    // Predicated region
    $region22: #{tpu_custom_call.1} parent=1 // pred_check
      _
    $region23: #{tpu_custom_call.1} parent=1 // pred_check_branch
      %57 = sbr.rel (0) target = $region25
    $region24: #{tpu_custom_call.1} parent=1 // pred_region
      _
    $region25: #{tpu_custom_call.1} parent=1 // pred_fallthru
      _
    // Predicated region
    $region26: #{tpu_custom_call.1} parent=1 // pred_check
      _
    $region27: #{tpu_custom_call.1} parent=1 // pred_check_branch
      %59 = sbr.rel (0) target = $region29
    $region28: #{tpu_custom_call.1} parent=1 // pred_region
      _
    $region29: #{tpu_custom_call.1} parent=1 // pred_fallthru
      _
    // Predicated region
    $region30: #{tpu_custom_call.1} parent=1 // pred_check
      _
    $region31: #{tpu_custom_call.1} parent=1 // pred_check_branch
      %61 = sbr.rel (0) target = $region33
    $region32: #{tpu_custom_call.1} parent=1 // pred_region
      _
    $region33: #{tpu_custom_call.1} parent=1 // pred_fallthru
      _
    // Predicated region
    $region34: #{tpu_custom_call.1} parent=1 // pred_check
      _
    $region35: #{tpu_custom_call.1} parent=1 // pred_check_branch
      %63 = sbr.rel (0) target = $region37
    $region36: #{tpu_custom_call.1} parent=1 // pred_region
      %64 = dma.done [#allocation4], 64
    $region37: #{tpu_custom_call.1} parent=1 // pred_fallthru
      _
    // Predicated region
    $region38: #{tpu_custom_call.1} parent=1 // pred_check
      _
    $region39: #{tpu_custom_call.1} parent=1 // pred_check_branch
      %66 = sbr.rel (0) target = $region41
    $region40: #{tpu_custom_call.1} parent=1 // pred_region
      %67 = dma.done [#allocation7], 128
    $region41: #{tpu_custom_call.1} parent=1 // pred_fallthru
      _
    // Predicated region
    $region42: #{tpu_custom_call.1} parent=1 // pred_check
      _
    $region43: #{tpu_custom_call.1} parent=1 // pred_check_branch
      %69 = sbr.rel (0) target = $region45
    $region44: #{tpu_custom_call.1} parent=1 // pred_region
      %70 = dma.done [#allocation7], 128
    $region45: #{tpu_custom_call.1} parent=1 // pred_fallthru
      _
    %v72 = vld [vmem:[#allocation3] sm:$0xf]
    %v73 = vld [vmem:[#allocation8] sm:$0xf]
    %v74 = vld [vmem:[#allocation8 + $0x4] sm:$0xf]
    %v75 = vld [vmem:[%s3] sm:$0x1]
    %v77 = vlaneseq
    %v78 = vshrl.u32 %v77, 7
    %v79 = vsub.s32 0, %v78
    %v80 = vrot.slane %v75, %v79
    %v84 = vunpack.c.l.b16 %v73
    %v85 = vunpack.c.l.b16 %v74
    %v86 = vpack.c.b16 %v85, %v84
    %vm88 = vcmask 130048
    %v90 = vsel %vm88, %v72, 0
    %92 = vmatprep.subr.bf16.mxu0 0
    %93 = vmatpush1.bf16.msra.mxu0 %v86
    %94 = vmatprep.subr.bf16.mxu0 0
    %95 = vmatpush1.bf16.msra.mxu0 0
    %96 = vmatprep.subr.bf16.mxu0 0
    %97 = vmatpush1.bf16.msra.mxu0 0
    %98 = vmatprep.subr.bf16.mxu0 0
    %99 = vmatpush1.bf16.msra.mxu0 0
    %100 = vmatprep.subr.bf16.mxu0 0
    %101 = vmatpush1.bf16.msra.mxu0 0
    %102 = vmatprep.subr.bf16.mxu0 0
    %103 = vmatpush1.bf16.msra.mxu0 0
    %104 = vmatprep.subr.bf16.mxu0 0
    %105 = vmatpush1.bf16.msra.mxu0 0
    %106 = vmatprep.subr.bf16.mxu0 0
    %107 = vmatpush1.bf16.msra.mxu0 0
    %108 = vmatprep.subr.bf16.mxu0 0
    %109 = vmatpush1.bf16.msra.mxu0 0
    %110 = vmatprep.subr.bf16.mxu0 0
    %111 = vmatpush1.bf16.msra.mxu0 0
    %112 = vmatprep.subr.bf16.mxu0 0
    %113 = vmatpush1.bf16.msra.mxu0 0
    %114 = vmatprep.subr.bf16.mxu0 0
    %115 = vmatpush1.bf16.msra.mxu0 0
    %116 = vmatprep.subr.bf16.mxu0 0
    %117 = vmatpush1.bf16.msra.mxu0 0
    %118 = vmatprep.subr.bf16.mxu0 0
    %119 = vmatpush1.bf16.msra.mxu0 0
    %120 = vmatprep.subr.bf16.mxu0 0
    %121 = vmatpush1.bf16.msra.mxu0 0
    %122 = vmatprep.subr.bf16.mxu0 0
    %123 = vmatpush1.bf16.msra.mxu0 0
    %124 = vmatprep.mubr.bf16.mxu0 0
    %125 = vmatmul.mubr.bf16.gmra.mrb[0].mxu0 %v90
    %v126 = vpop.f32.mrb[0].mxu0
    %v127 = vadd.f32 %v80, %v126
    %v128 = vpop.f32.mrb[0].mxu0
    %v129 = vpop.f32.mrb[0].mxu0
    %v130 = vpop.f32.mrb[0].mxu0
    %131 = vdwg.mxu0
    %v132 = vld [vmem:[#allocation6] sm:$0xff]
    %v133 = vmul.f32 %v132, 0.5
    %v134 = vadd.f32 %v127, %v133
    %v135 = vtanh.pop %v134
    %v136 = vpack.c.bf16 %v135, %v135
    %v137 = vld [vmem:[%s4] sm:$0xf]
    %v138 = vld [vmem:[%s4 + $0x4] sm:$0xf]
    %v139 = vld [vmem:[%s4 + $0x8] sm:$0xf]
    %v140 = vld [vmem:[%s4 + $0xc] sm:$0xf]
    %v141 = vld [vmem:[%s5] sm:$0x1]
    %v143 = vlaneseq
    %v144 = vshrl.u32 %v143, 7
    %v145 = vsub.s32 0, %v144
    %v146 = vrot.slane %v141, %v145
    %v152 = vunpack.c.l.b16 %v137
    %v153 = vunpack.c.l.b16 %v138
    %v154 = vunpack.c.l.b16 %v139
    %v155 = vunpack.c.l.b16 %v140
    %v156 = vpack.c.b16 %v153, %v152
    %v157 = vpack.c.b16 %v155, %v154
    %vm160 = vcmask 261120
    %v162 = vsel %vm160, %v136, 0
    %164 = vmatprep.subr.bf16.mxu0 0
    %165 = vmatpush1.bf16.msra.mxu0 %v156
    %166 = vmatprep.subr.bf16.mxu0 0
    %167 = vmatpush1.bf16.msra.mxu0 %v157
    %168 = vmatprep.subr.bf16.mxu0 0
    %169 = vmatpush1.bf16.msra.mxu0 0
    %170 = vmatprep.subr.bf16.mxu0 0
    %171 = vmatpush1.bf16.msra.mxu0 0
    %172 = vmatprep.subr.bf16.mxu0 0
    %173 = vmatpush1.bf16.msra.mxu0 0
    %174 = vmatprep.subr.bf16.mxu0 0
    %175 = vmatpush1.bf16.msra.mxu0 0
    %176 = vmatprep.subr.bf16.mxu0 0
    %177 = vmatpush1.bf16.msra.mxu0 0
    %178 = vmatprep.subr.bf16.mxu0 0
    %179 = vmatpush1.bf16.msra.mxu0 0
    %180 = vmatprep.subr.bf16.mxu0 0
    %181 = vmatpush1.bf16.msra.mxu0 0
    %182 = vmatprep.subr.bf16.mxu0 0
    %183 = vmatpush1.bf16.msra.mxu0 0
    %184 = vmatprep.subr.bf16.mxu0 0
    %185 = vmatpush1.bf16.msra.mxu0 0
    %186 = vmatprep.subr.bf16.mxu0 0
    %187 = vmatpush1.bf16.msra.mxu0 0
    %188 = vmatprep.subr.bf16.mxu0 0
    %189 = vmatpush1.bf16.msra.mxu0 0
    %190 = vmatprep.subr.bf16.mxu0 0
    %191 = vmatpush1.bf16.msra.mxu0 0
    %192 = vmatprep.subr.bf16.mxu0 0
    %193 = vmatpush1.bf16.msra.mxu0 0
    %194 = vmatprep.subr.bf16.mxu0 0
    %195 = vmatpush1.bf16.msra.mxu0 0
    %196 = vmatprep.mubr.bf16.mxu0 0
    %197 = vmatmul.mubr.bf16.gmra.mrb[0].mxu0 %v162
    %v198 = vpop.f32.mrb[0].mxu0
    %v199 = vadd.f32 %v146, %v198
    %v200 = vpop.f32.mrb[0].mxu0
    %v201 = vpop.f32.mrb[0].mxu0
    %v202 = vpop.f32.mrb[0].mxu0
    %203 = vdwg.mxu0
    %205 = vrot.lane.b32.xlu0 %v133, 96
    %v206 = vpop.permute.xlu0 %205
    %v208 = vadd.f32 %v199, %v206
    %v209 = vtanh.pop %v208
    %211 = vrot.lane.b32.xlu0 %v208, 32
    %v212 = vpop.permute.xlu0 %211
    %215 = vrot.lane.b32.xlu0 %v135, 64
    %v216 = vpop.permute.xlu0 %215
    %219 = vrot.lane.b32.xlu0 %v209, 96
    %v220 = vpop.permute.xlu0 %219
    %v222 = vsel %vm160, %v134, %v212
    %vm223 = vcmask 523264
    %v224 = vsel %vm223, %v222, %v216
    %vm225 = vcmask 785408
    %v226 = vsel %vm225, %v224, %v220
    %227 = vst [vmem:[#allocation9] sm:$0xff] %v226
    %v228 = vld [vmem:[%s6] sm:$0x1]
    %v230 = vlaneseq
    %v231 = vshrl.u32 %v230, 7
    %v232 = vsub.s32 0, %v231
    %v233 = vrot.slane %v228, %v232
    %v235 = vmul.f32 %v209, %v233
    %v236 = vsel %vm160, %v235, 0.0
    %237 = vadd.xlane.f32.xlu0 %v236
    %v238 = vpop.xlane.xlu0 %237
    %v239 = vld [vmem:[#allocation2] sm:$0x1]
    %v241 = vlaneseq
    %v242 = vshrl.u32 %v241, 7
    %v243 = vsub.s32 0, %v242
    %v244 = vrot.slane %v239, %v243
    %v246 = vadd.f32 %v238, %v244
    %vm247 = vcmask 7168
    %248 = vst.msk [vmem:[%s8] sm:$0xff] %vm247, %v246
    // Predicated region
    $region46: #{tpu_custom_call.1} parent=1 // pred_check
      _
    $region47: #{tpu_custom_call.1} parent=1 // pred_check_branch
      %250 = sbr.rel (0) target = $region49
    $region48: #{tpu_custom_call.1} parent=1 // pred_region
      _
    $region49: #{tpu_custom_call.1} parent=1 // pred_fallthru
      _
    // Predicated region
    $region50: #{tpu_custom_call.1} parent=1 // pred_check
      _
    $region51: #{tpu_custom_call.1} parent=1 // pred_check_branch
      %252 = sbr.rel (0) target = $region53
    $region52: #{tpu_custom_call.1} parent=1 // pred_region
      %s254 = ssub.s32 128, 128
      %255 = vsyncadd [#allocation5], %s254
      %s257 = sshll.u32 [#allocation9], 4
      %s258 = int_to_ptr.vmem [resolvable:$true] %s257
      %260 = dma.vmem_to_hbm [thread:$0]  %s258, 128, %s9, [#allocation5]
    $region53: #{tpu_custom_call.1} parent=1 // pred_fallthru
      _
    // Predicated region
    $region54: #{tpu_custom_call.1} parent=1 // pred_check
      _
    $region55: #{tpu_custom_call.1} parent=1 // pred_check_branch
      %262 = sbr.rel (0) target = $region57
    $region56: #{tpu_custom_call.1} parent=1 // pred_region
      _
    $region57: #{tpu_custom_call.1} parent=1 // pred_fallthru
      _
    // Predicated region
    $region58: #{tpu_custom_call.1} parent=1 // pred_check
      _
    $region59: #{tpu_custom_call.1} parent=1 // pred_check_branch
      %264 = sbr.rel (0) target = $region61
    $region60: #{tpu_custom_call.1} parent=1 // pred_region
      %265 = dma.done [#allocation5], 128
    $region61: #{tpu_custom_call.1} parent=1 // pred_fallthru
      _
    %266 = vsyncpa [#allocation4], 1
    %267 = vsyncpa [#allocation7], 1
    %268 = vsyncpa [#allocation5], 1

</llo_original>
